<compile_context>
chip_gen: v5e
topology: v5e:2x2
jax: 0.10.0
libtpu: 0.0.40
codegen_flags: <defaults>
</compile_context>

<pallas_src>
import functools

import jax
import jax.numpy as jnp
from jax.experimental import pallas as pl
from jax.experimental.pallas import tpu as pltpu


def _attention_kernel(x_ref, w1_ref, b1_ref, w2_ref, b2_ref, o_ref, *, seq, d1):
    # x_ref: [GB, S*D1] float32, lane-dense. Row = one instance; lane t*D1+d = x[t, d].
    xq = x_ref[...].astype(w1_ref.dtype)            # bf16 feed to the MXU (only copy kept live)

    # Linear 1 via the seq-block-diagonal folded weight: K = S*D1, N = S*D2.  f32 accumulate.
    h = jnp.dot(xq, w1_ref[...], preferred_element_type=jnp.float32)    # [GB, S*D2]
    h = jnp.maximum(h + b1_ref[...], 0.0)

    # Linear 2 via the folded weight: K = S*D2, N = S*D1.  f32 accumulate.
    s = jnp.dot(h.astype(w2_ref.dtype), w2_ref[...],
                preferred_element_type=jnp.float32)                     # [GB, S*D1]
    s = s + b2_ref[...]

    # Softmax over the sequence axis.  Seq position t of feature d sits at lane t*D1+d, so the
    # reduction is over the S lanes with stride D1.  Circular-roll tree (XLU slot, free next to
    # the VPU work); every lane ends up holding its own group's max / sum, already broadcast.
    lane_extent = seq * d1
    m = s
    shift = d1
    while shift < lane_extent:                      # unrolled at trace time (log2(S) steps)
        m = jnp.maximum(m, pltpu.roll(m, shift, axis=1))
        shift *= 2
    e = jnp.exp(s - m)
    den = e
    shift = d1
    while shift < lane_extent:
        den = den + pltpu.roll(den, shift, axis=1)
        shift *= 2
    attn = e * pl.reciprocal(den, approx=False)     # exact normalization (sums to 1)

    # Re-read x from VMEM for the final multiply (keeps the f32 tile's live range short).
    # Lane-dense store: last dim is a multiple of 128 -> unmasked vst.
    o_ref[...] = (x_ref[...] * attn).astype(o_ref.dtype)


def make_attention_fn(w1, b1, w2, b2, *, seq_len, block_rows=1024, mxu_dtype=jnp.bfloat16):
    """Builds a batched forward fn.  Weights are folded ONCE here (not per call).

    w1: [D2, D1], b1: [D2], w2: [D1, D2], b2: [D1]   (PyTorch nn.Linear layout).
    Returned fn maps x [B, S, D1] -> out [B, S, D1], applying the module's softmax(dim=0)
    independently to each [S, D1] instance.  No HBM transposes anywhere.
    """
    D2, D1 = w1.shape
    S = int(seq_len)
    assert w2.shape == (D1, D2)
    assert S >= 1 and (S & (S - 1)) == 0, "roll-tree softmax needs power-of-two seq length"
    # TODO(synk): non power-of-two S needs a different in-kernel sequence reduction.

    # --- one-time parameter folding: block-diagonal over the S sequence positions, with the
    # PyTorch-layout transpose folded in (no per-call w.T materialization). ---
    eye = jnp.eye(S, dtype=jnp.float32)
    w1f = jnp.asarray(w1, jnp.float32)
    w2f = jnp.asarray(w2, jnp.float32)
    # w1_fold[s*D1+d, t*D2+e] = (s==t) * w1[e, d]
    w1_fold = jnp.einsum("st,ed->sdte", eye, w1f).reshape(S * D1, S * D2).astype(mxu_dtype)
    # w2_fold[s*D2+e, t*D1+d] = (s==t) * w2[d, e]
    w2_fold = jnp.einsum("st,de->setd", eye, w2f).reshape(S * D2, S * D1).astype(mxu_dtype)
    b1_fold = jnp.tile(jnp.asarray(b1, jnp.float32).reshape(1, D2), (1, S))   # [1, S*D2]
    b2_fold = jnp.tile(jnp.asarray(b2, jnp.float32).reshape(1, D1), (1, S))   # [1, S*D1]

    kernel = functools.partial(_attention_kernel, seq=S, d1=D1)

    @jax.jit
    def fwd(x):
        B, s_in, d_in = x.shape
        assert s_in == S and d_in == D1

        # Free layout view: merge the contiguous minor dims (no HBM read/write).
        x_f = x.reshape(B, S * D1)

        gb = B if B <= block_rows else block_rows       # rows (instances) per grid step
        grid = (pl.cdiv(B, gb),)

        out_f = pl.pallas_call(
            kernel,
            out_shape=jax.ShapeDtypeStruct((B, S * D1), x.dtype),
            grid=grid,
            in_specs=[
                # x tile: gb instances, full (lane-dense) S*D1 row per instance.
                pl.BlockSpec((gb, S * D1), lambda g: (g, 0)),
                # Folded weights / biases: constant block index -> stay resident in VMEM.
                pl.BlockSpec((S * D1, S * D2), lambda g: (0, 0)),
                pl.BlockSpec((1, S * D2), lambda g: (0, 0)),
                pl.BlockSpec((S * D2, S * D1), lambda g: (0, 0)),
                pl.BlockSpec((1, S * D1), lambda g: (0, 0)),
            ],
            out_specs=pl.BlockSpec((gb, S * D1), lambda g: (g, 0)),
            compiler_params=pltpu.CompilerParams(
                # Row blocks are independent -> shard across v7x's 2 TensorCores.
                dimension_semantics=("parallel",),
                # Working set is a few MiB; 32 MiB is safe on v5e/v6e (128 MiB) and v7x (64 MiB).
                vmem_limit_bytes=32 * 1024 * 1024,
            ),
        )(x_f, w1_fold, b1_fold, w2_fold, b2_fold)

        # Free layout view back to the natural [B, S, D1] shape.
        return out_f.reshape(B, S, D1)

    return fwd


def attention_reference(x, w1, b1, w2, b2, matmul_dtype=jnp.float32):
    """Pure-JAX reference; matmul_dtype=bf16 mirrors the kernel's MXU precision."""
    h = jnp.einsum("bsd,ed->bse", x.astype(matmul_dtype), w1.astype(matmul_dtype),
                   preferred_element_type=jnp.float32) + b1
    h = jnp.maximum(h, 0.0)
    s = jnp.einsum("bse,de->bsd", h.astype(matmul_dtype), w2.astype(matmul_dtype),
                   preferred_element_type=jnp.float32) + b2
    attn = jax.nn.softmax(s, axis=1)   # softmax over seq == torch softmax(dim=0) per instance
    return x * attn


if __name__ == "__main__":
    # attention_size_1 = 32, attention_size_2 = 16, seq = 8, batch of 8 independent instances.
    # Whole problem fits one grid step: grid = (1,), block (8, 256), lane-dense in and out.
    B, S, D1, D2 = 8, 8, 32, 16

    key = jax.random.PRNGKey(0)
    kx, kw1, kb1, kw2, kb2 = jax.random.split(key, 5)

    x = jax.random.normal(kx, (B, S, D1), dtype=jnp.float32)

    # PyTorch nn.Linear-style uniform init bounds.
    bound1 = 1.0 / (D1 ** 0.5)
    w1 = jax.random.uniform(kw1, (D2, D1), minval=-bound1, maxval=bound1, dtype=jnp.float32)
    b1 = jax.random.uniform(kb1, (D2,), minval=-bound1, maxval=bound1, dtype=jnp.float32)
    bound2 = 1.0 / (D2 ** 0.5)
    w2 = jax.random.uniform(kw2, (D1, D2), minval=-bound2, maxval=bound2, dtype=jnp.float32)
    b2 = jax.random.uniform(kb2, (D1,), minval=-bound2, maxval=bound2, dtype=jnp.float32)

    attn_fn = make_attention_fn(w1, b1, w2, b2, seq_len=S)   # weights folded once, bf16 MXU feed
    out = jax.block_until_ready(attn_fn(x))
    assert out.shape == (B, S, D1)

    # Tight check vs a precision-matched (bf16-MXU / f32-accumulate) reference.
    ref_bf16 = attention_reference(x, w1, b1, w2, b2, matmul_dtype=jnp.bfloat16)
    assert jnp.allclose(out, ref_bf16, atol=5e-3, rtol=5e-3), "mismatch vs bf16-matched reference"

    # Loose sanity check vs the full-f32 reference (bounds bf16 quantization error).
    ref_f32 = attention_reference(x, w1, b1, w2, b2, matmul_dtype=jnp.float32)
    assert jnp.allclose(out, ref_f32, atol=1e-1, rtol=1e-1), "mismatch vs f32 reference"

    print("KERNEL_OK")
</pallas_src>

<mosaic_0001>
module attributes {stable_mosaic.version = 11 : i64} {
  func.func @_attention_kernel(%arg0: i32, %arg1: memref<8x256xf32, #tpu.memory_space<vmem>>, %arg2: memref<256x128xbf16, #tpu.memory_space<vmem>>, %arg3: memref<1x128xf32, #tpu.memory_space<vmem>>, %arg4: memref<128x256xbf16, #tpu.memory_space<vmem>>, %arg5: memref<1x256xf32, #tpu.memory_space<vmem>>, %arg6: memref<8x256xf32, #tpu.memory_space<vmem>>) attributes {dimension_semantics = [#tpu.dimension_semantics<parallel>], iteration_bounds = array<i64: 1>, scalar_prefetch = 0 : i64, scratch_operands = 0 : i64, tpu.core_type = #tpu.core_type<tc>, window_params = [{transform_indices = @transform_0, window_bounds = array<i64: 8, 256>}, {pipeline_mode = #tpu.pipeline_mode<synchronous>, transform_indices = @transform_1, window_bounds = array<i64: 256, 128>}, {pipeline_mode = #tpu.pipeline_mode<synchronous>, transform_indices = @transform_2, window_bounds = array<i64: 1, 128>}, {pipeline_mode = #tpu.pipeline_mode<synchronous>, transform_indices = @transform_3, window_bounds = array<i64: 128, 256>}, {pipeline_mode = #tpu.pipeline_mode<synchronous>, transform_indices = @transform_4, window_bounds = array<i64: 1, 256>}, {transform_indices = @transform_5, window_bounds = array<i64: 8, 256>}]} {
    %c0 = arith.constant 0 : index
    %c0_0 = arith.constant 0 : index
    %0 = vector.load %arg1[%c0, %c0_0] : memref<8x256xf32, #tpu.memory_space<vmem>>, vector<8x256xf32>
    %1 = arith.truncf %0 : vector<8x256xf32> to vector<8x256xbf16>
    %c0_1 = arith.constant 0 : index
    %c0_2 = arith.constant 0 : index
    %2 = vector.load %arg2[%c0_1, %c0_2] : memref<256x128xbf16, #tpu.memory_space<vmem>>, vector<256x128xbf16>
    %cst = arith.constant dense<0.000000e+00> : vector<8x128xf32>
    %3 = tpu.matmul %1, %2, %cst {dimension_numbers = #tpu.dot_dimension_numbers<[1], [0], [0], [1], [0, 0, 1, 1], [], []>} : vector<8x256xbf16>, vector<256x128xbf16>, vector<8x128xf32> -> vector<8x128xf32>
    %c0_3 = arith.constant 0 : index
    %c0_4 = arith.constant 0 : index
    %4 = vector.load %arg3[%c0_3, %c0_4] : memref<1x128xf32, #tpu.memory_space<vmem>>, vector<1x128xf32>
    %5 = vector.broadcast %4 : vector<1x128xf32> to vector<8x128xf32>
    %6 = arith.addf %3, %5 : vector<8x128xf32>
    %cst_5 = arith.constant 0.000000e+00 : f32
    %7 = vector.broadcast %cst_5 : f32 to vector<8x128xf32>
    %8 = arith.maximumf %6, %7 : vector<8x128xf32>
    %9 = arith.truncf %8 : vector<8x128xf32> to vector<8x128xbf16>
    %c0_6 = arith.constant 0 : index
    %c0_7 = arith.constant 0 : index
    %10 = vector.load %arg4[%c0_6, %c0_7] : memref<128x256xbf16, #tpu.memory_space<vmem>>, vector<128x256xbf16>
    %cst_8 = arith.constant dense<0.000000e+00> : vector<8x256xf32>
    %11 = tpu.matmul %9, %10, %cst_8 {dimension_numbers = #tpu.dot_dimension_numbers<[1], [0], [0], [1], [0, 0, 1, 1], [], []>} : vector<8x128xbf16>, vector<128x256xbf16>, vector<8x256xf32> -> vector<8x256xf32>
    %c0_9 = arith.constant 0 : index
    %c0_10 = arith.constant 0 : index
    %12 = vector.load %arg5[%c0_9, %c0_10] : memref<1x256xf32, #tpu.memory_space<vmem>>, vector<1x256xf32>
    %13 = vector.broadcast %12 : vector<1x256xf32> to vector<8x256xf32>
    %14 = arith.addf %11, %13 : vector<8x256xf32>
    %c32_i32 = arith.constant 32 : i32
    %15 = tpu.dynamic_rotate %14 by %c32_i32 dim 1 : vector<8x256xf32>, i32 -> vector<8x256xf32>
    %16 = arith.maximumf %14, %15 : vector<8x256xf32>
    %c64_i32 = arith.constant 64 : i32
    %17 = tpu.dynamic_rotate %16 by %c64_i32 dim 1 : vector<8x256xf32>, i32 -> vector<8x256xf32>
    %18 = arith.maximumf %16, %17 : vector<8x256xf32>
    %c128_i32 = arith.constant 128 : i32
    %19 = tpu.dynamic_rotate %18 by %c128_i32 dim 1 : vector<8x256xf32>, i32 -> vector<8x256xf32>
    %20 = arith.maximumf %18, %19 : vector<8x256xf32>
    %21 = arith.subf %14, %20 : vector<8x256xf32>
    %22 = math.exp %21 : vector<8x256xf32>
    %c32_i32_11 = arith.constant 32 : i32
    %23 = tpu.dynamic_rotate %22 by %c32_i32_11 dim 1 : vector<8x256xf32>, i32 -> vector<8x256xf32>
    %24 = arith.addf %22, %23 : vector<8x256xf32>
    %c64_i32_12 = arith.constant 64 : i32
    %25 = tpu.dynamic_rotate %24 by %c64_i32_12 dim 1 : vector<8x256xf32>, i32 -> vector<8x256xf32>
    %26 = arith.addf %24, %25 : vector<8x256xf32>
    %c128_i32_13 = arith.constant 128 : i32
    %27 = tpu.dynamic_rotate %26 by %c128_i32_13 dim 1 : vector<8x256xf32>, i32 -> vector<8x256xf32>
    %28 = arith.addf %26, %27 : vector<8x256xf32>
    %29 = tpu.reciprocal %28 : vector<8x256xf32> -> vector<8x256xf32>
    %30 = arith.mulf %22, %29 : vector<8x256xf32>
    %c0_14 = arith.constant 0 : index
    %c0_15 = arith.constant 0 : index
    %31 = vector.load %arg1[%c0_14, %c0_15] : memref<8x256xf32, #tpu.memory_space<vmem>>, vector<8x256xf32>
    %32 = arith.mulf %31, %30 : vector<8x256xf32>
    %c0_16 = arith.constant 0 : index
    %c0_17 = arith.constant 0 : index
    %33 = vector.load %arg6[%c0_16, %c0_17] : memref<8x256xf32, #tpu.memory_space<vmem>>, vector<8x256xf32>
    tpu.vector_store %arg6[%c0_16, %c0_17], %32 {strides = array<i32>} : memref<8x256xf32, #tpu.memory_space<vmem>>, vector<8x256xf32>,
    return
  }
  func.func @transform_0(%arg0: i32) -> (i32, i32) {
    %c0_i32 = arith.constant 0 : i32
    %c0_i32_0 = arith.constant 0 : i32
    return %arg0, %c0_i32 : i32, i32
  }
  func.func @transform_1(%arg0: i32) -> (i32, i32) {
    %c0_i32 = arith.constant 0 : i32
    %c0_i32_0 = arith.constant 0 : i32
    %c0_i32_1 = arith.constant 0 : i32
    return %c0_i32, %c0_i32_0 : i32, i32
  }
  func.func @transform_2(%arg0: i32) -> (i32, i32) {
    %c0_i32 = arith.constant 0 : i32
    %c0_i32_0 = arith.constant 0 : i32
    %c0_i32_1 = arith.constant 0 : i32
    return %c0_i32, %c0_i32_0 : i32, i32
  }
  func.func @transform_3(%arg0: i32) -> (i32, i32) {
    %c0_i32 = arith.constant 0 : i32
    %c0_i32_0 = arith.constant 0 : i32
    %c0_i32_1 = arith.constant 0 : i32
    return %c0_i32, %c0_i32_0 : i32, i32
  }
  func.func @transform_4(%arg0: i32) -> (i32, i32) {
    %c0_i32 = arith.constant 0 : i32
    %c0_i32_0 = arith.constant 0 : i32
    %c0_i32_1 = arith.constant 0 : i32
    return %c0_i32, %c0_i32_0 : i32, i32
  }
  func.func @transform_5(%arg0: i32) -> (i32, i32) {
    %c0_i32 = arith.constant 0 : i32
    %c0_i32_0 = arith.constant 0 : i32
    return %arg0, %c0_i32 : i32, i32
  }
}

</mosaic_0001>

<llo_original>
// kernel: fwd.1
$region0: #{fwd.1}
  #allocation0 [shape = 'u32[]', space=smem, size = 0x4, offset = 0x4, fixed_abs, tag = 'smem constant byte address 0x4 - core index']
  #allocation1 [shape = 'u32[72,128]{1,0:T(1,128)}', space=vmem, size = 0x9000, scoped, tag = 'internal scratch']
  %s0 = inlined_call_operand.vmem [shape: f32[8,256], index: 0, kind: input, shape index: {}]
  %s1 = inlined_call_operand.hbm [shape: bf16[256,128], index: 1, kind: input, shape index: {}]
  %s2 = inlined_call_operand.vmem [shape: f32[1,128], index: 2, kind: input, shape index: {}]
  %s3 = inlined_call_operand.hbm [shape: bf16[128,256], index: 3, kind: input, shape index: {}]
  %s4 = inlined_call_operand.vmem [shape: f32[1,256], index: 4, kind: input, shape index: {}]
  %s5 = inlined_call_operand.vmem [shape: f32[8,256], index: 5, kind: output, shape index: {}]
  %s6 = sld [smem:[#allocation0]]
  $region38: #{fwd.1} parent=0
    _
  %s8 = ssub.s32 1, %s6
  %s9 = scalar_select 0, %s8, %s6
  $region1: #{fwd.1} parent=0
    #allocation2 [shape = 'u8[65536]{0}', space=vmem, size = 0x10000, scoped, tag = 'input window, operand 1, single buffered']
    #allocation3 [shape = 's32[1]{0}', space=sflag, size = 0x4, scoped, tag = 'scoped memory for fwd.1']
    #allocation4 [shape = 'u8[65536]{0}', space=vmem, size = 0x10000, scoped, tag = 'input window, operand 3, single buffered']
    #allocation5 [shape = 's32[1]{0}', space=sflag, size = 0x4, scoped, tag = 'scoped memory for fwd.1']
    %10 = vsyncpa [#allocation3], 0
    %11 = vsyncpa [#allocation5], 0
    // Predicated region
    $region2: #{fwd.1} parent=1 // pred_check
      _
    $region3: #{fwd.1} parent=1 // pred_check_branch
      %13 = sbr.rel (0) target = $region5
    $region4: #{fwd.1} parent=1 // pred_region
      _
    $region5: #{fwd.1} parent=1 // pred_fallthru
      _
    // Predicated region
    $region6: #{fwd.1} parent=1 // pred_check
      _
    $region7: #{fwd.1} parent=1 // pred_check_branch
      %15 = sbr.rel (0) target = $region9
    $region8: #{fwd.1} parent=1 // pred_region
      %17 = vsyncadd [#allocation3], 0
      %s18 = sshll.u32 %s1, 4
      %s19 = int_to_ptr.hbm [resolvable:$true] %s18
      %s20 = sshll.u32 [#allocation2], 4
      %s21 = int_to_ptr.vmem [resolvable:$true] %s20
      %26 = dma.hbm_to_vmem [thread:$0]  %s19, 2048, %s21, [#allocation3], 64, 64, 4
    $region9: #{fwd.1} parent=1 // pred_fallthru
      _
    // Predicated region
    $region10: #{fwd.1} parent=1 // pred_check
      _
    $region11: #{fwd.1} parent=1 // pred_check_branch
      %28 = sbr.rel (0) target = $region13
    $region12: #{fwd.1} parent=1 // pred_region
      _
    $region13: #{fwd.1} parent=1 // pred_fallthru
      _
    // Predicated region
    $region14: #{fwd.1} parent=1 // pred_check
      _
    $region15: #{fwd.1} parent=1 // pred_check_branch
      %30 = sbr.rel (0) target = $region17
    $region16: #{fwd.1} parent=1 // pred_region
      %32 = vsyncadd [#allocation5], 0
      %s33 = sshll.u32 %s3, 4
      %s34 = int_to_ptr.hbm [resolvable:$true] %s33
      %s35 = sshll.u32 [#allocation4], 4
      %s36 = int_to_ptr.vmem [resolvable:$true] %s35
      %41 = dma.hbm_to_vmem [thread:$0]  %s34, 2048, %s36, [#allocation5], 128, 128, 8
    $region17: #{fwd.1} parent=1 // pred_fallthru
      _
    // Predicated region
    $region18: #{fwd.1} parent=1 // pred_check
      _
    $region19: #{fwd.1} parent=1 // pred_check_branch
      %43 = sbr.rel (0) target = $region21
    $region20: #{fwd.1} parent=1 // pred_region
      _
    $region21: #{fwd.1} parent=1 // pred_fallthru
      _
    // Predicated region
    $region22: #{fwd.1} parent=1 // pred_check
      _
    $region23: #{fwd.1} parent=1 // pred_check_branch
      %45 = sbr.rel (0) target = $region25
    $region24: #{fwd.1} parent=1 // pred_region
      %47 = dma.done [#allocation3], 2048
    $region25: #{fwd.1} parent=1 // pred_fallthru
      _
    // Predicated region
    $region26: #{fwd.1} parent=1 // pred_check
      _
    $region27: #{fwd.1} parent=1 // pred_check_branch
      %49 = sbr.rel (0) target = $region29
    $region28: #{fwd.1} parent=1 // pred_region
      %51 = dma.done [#allocation5], 2048
    $region29: #{fwd.1} parent=1 // pred_fallthru
      _
    %v52 = vld [vmem:[%s0] sm:$0xff]
    %v53 = vld [vmem:[%s0 + $0x8] sm:$0xff]
    %v54 = vpack.c.bf16 %v52, %v52
    %v55 = vpack.c.bf16 %v53, %v53
    %v56 = vld [vmem:[#allocation2] sm:$0xf]
    %v57 = vld [vmem:[#allocation2 + $0x4] sm:$0xf]
    %v58 = vld [vmem:[#allocation2 + $0x8] sm:$0xf]
    %v59 = vld [vmem:[#allocation2 + $0xc] sm:$0xf]
    %v60 = vld [vmem:[#allocation2 + $0x10] sm:$0xf]
    %v61 = vld [vmem:[#allocation2 + $0x14] sm:$0xf]
    %v62 = vld [vmem:[#allocation2 + $0x18] sm:$0xf]
    %v63 = vld [vmem:[#allocation2 + $0x1c] sm:$0xf]
    %v64 = vld [vmem:[#allocation2 + $0x20] sm:$0xf]
    %v65 = vld [vmem:[#allocation2 + $0x24] sm:$0xf]
    %v66 = vld [vmem:[#allocation2 + $0x28] sm:$0xf]
    %v67 = vld [vmem:[#allocation2 + $0x2c] sm:$0xf]
    %v68 = vld [vmem:[#allocation2 + $0x30] sm:$0xf]
    %v69 = vld [vmem:[#allocation2 + $0x34] sm:$0xf]
    %v70 = vld [vmem:[#allocation2 + $0x38] sm:$0xf]
    %v71 = vld [vmem:[#allocation2 + $0x3c] sm:$0xf]
    %v72 = vld [vmem:[#allocation2 + $0x40] sm:$0xf]
    %v73 = vld [vmem:[#allocation2 + $0x44] sm:$0xf]
    %v74 = vld [vmem:[#allocation2 + $0x48] sm:$0xf]
    %v75 = vld [vmem:[#allocation2 + $0x4c] sm:$0xf]
    %v76 = vld [vmem:[#allocation2 + $0x50] sm:$0xf]
    %v77 = vld [vmem:[#allocation2 + $0x54] sm:$0xf]
    %v78 = vld [vmem:[#allocation2 + $0x58] sm:$0xf]
    %v79 = vld [vmem:[#allocation2 + $0x5c] sm:$0xf]
    %v80 = vld [vmem:[#allocation2 + $0x60] sm:$0xf]
    %v81 = vld [vmem:[#allocation2 + $0x64] sm:$0xf]
    %v82 = vld [vmem:[#allocation2 + $0x68] sm:$0xf]
    %v83 = vld [vmem:[#allocation2 + $0x6c] sm:$0xf]
    %v84 = vld [vmem:[#allocation2 + $0x70] sm:$0xf]
    %v85 = vld [vmem:[#allocation2 + $0x74] sm:$0xf]
    %v86 = vld [vmem:[#allocation2 + $0x78] sm:$0xf]
    %v87 = vld [vmem:[#allocation2 + $0x7c] sm:$0xf]
    %v88 = vld [vmem:[%s2] sm:$0x1]
    %v90 = vperm.slane %v88, 0
    %v124 = vunpack.c.l.b16 %v56
    %v125 = vunpack.c.l.b16 %v57
    %v126 = vunpack.c.l.b16 %v58
    %v127 = vunpack.c.l.b16 %v59
    %v128 = vunpack.c.l.b16 %v60
    %v129 = vunpack.c.l.b16 %v61
    %v130 = vunpack.c.l.b16 %v62
    %v131 = vunpack.c.l.b16 %v63
    %v132 = vunpack.c.l.b16 %v64
    %v133 = vunpack.c.l.b16 %v65
    %v134 = vunpack.c.l.b16 %v66
    %v135 = vunpack.c.l.b16 %v67
    %v136 = vunpack.c.l.b16 %v68
    %v137 = vunpack.c.l.b16 %v69
    %v138 = vunpack.c.l.b16 %v70
    %v139 = vunpack.c.l.b16 %v71
    %v140 = vunpack.c.l.b16 %v72
    %v141 = vunpack.c.l.b16 %v73
    %v142 = vunpack.c.l.b16 %v74
    %v143 = vunpack.c.l.b16 %v75
    %v144 = vunpack.c.l.b16 %v76
    %v145 = vunpack.c.l.b16 %v77
    %v146 = vunpack.c.l.b16 %v78
    %v147 = vunpack.c.l.b16 %v79
    %v148 = vunpack.c.l.b16 %v80
    %v149 = vunpack.c.l.b16 %v81
    %v150 = vunpack.c.l.b16 %v82
    %v151 = vunpack.c.l.b16 %v83
    %v152 = vunpack.c.l.b16 %v84
    %v153 = vunpack.c.l.b16 %v85
    %v154 = vunpack.c.l.b16 %v86
    %v155 = vunpack.c.l.b16 %v87
    %v156 = vpack.c.b16 %v125, %v124
    %v157 = vpack.c.b16 %v127, %v126
    %v158 = vpack.c.b16 %v129, %v128
    %v159 = vpack.c.b16 %v131, %v130
    %v160 = vpack.c.b16 %v133, %v132
    %v161 = vpack.c.b16 %v135, %v134
    %v162 = vpack.c.b16 %v137, %v136
    %v163 = vpack.c.b16 %v139, %v138
    %v164 = vpack.c.b16 %v141, %v140
    %v165 = vpack.c.b16 %v143, %v142
    %v166 = vpack.c.b16 %v145, %v144
    %v167 = vpack.c.b16 %v147, %v146
    %v168 = vpack.c.b16 %v149, %v148
    %v169 = vpack.c.b16 %v151, %v150
    %v170 = vpack.c.b16 %v153, %v152
    %v171 = vpack.c.b16 %v155, %v154
    %188 = vmatpush.bf16.msra.mxu0 %v163
    %189 = vmatpush.bf16.msra.mxu0 %v162
    %190 = vmatpush.bf16.msra.mxu0 %v161
    %191 = vmatpush.bf16.msra.mxu0 %v160
    %192 = vmatpush.bf16.msra.mxu0 %v159
    %193 = vmatpush.bf16.msra.mxu0 %v158
    %194 = vmatpush.bf16.msra.mxu0 %v157
    %195 = vmatpush.bf16.msra.mxu0 %v156
    %196 = vmatmul.bf16.gmra.mxu0 %v54
    %v197 = vpop.f32.mrf.mxu0
    %v198 = vadd.f32 %v90, %v197
    %v199 = vpop.f32.mrf.mxu0
    %200 = vdwg.mxu0
    %201 = vmatpush.bf16.msra.mxu0 %v171
    %202 = vmatpush.bf16.msra.mxu0 %v170
    %203 = vmatpush.bf16.msra.mxu0 %v169
    %204 = vmatpush.bf16.msra.mxu0 %v168
    %205 = vmatpush.bf16.msra.mxu0 %v167
    %206 = vmatpush.bf16.msra.mxu0 %v166
    %207 = vmatpush.bf16.msra.mxu0 %v165
    %208 = vmatpush.bf16.msra.mxu0 %v164
    %209 = vmatmul.bf16.gmra.mxu0 %v55
    %v210 = vpop.f32.mrf.mxu0
    %v211 = vadd.f32 %v198, %v210
    %v212 = vpop.f32.mrf.mxu0
    %213 = vdwg.mxu0
    %v214 = vmax.f32 %v211, 0.0
    %v215 = vpack.c.bf16 %v214, %v214
    %v216 = vld [vmem:[#allocation4] sm:$0xff]
    %v217 = vld [vmem:[#allocation4 + $0x8] sm:$0xff]
    %v218 = vld [vmem:[#allocation4 + $0x10] sm:$0xff]
    %v219 = vld [vmem:[#allocation4 + $0x18] sm:$0xff]
    %v220 = vld [vmem:[#allocation4 + $0x20] sm:$0xff]
    %v221 = vld [vmem:[#allocation4 + $0x28] sm:$0xff]
    %v222 = vld [vmem:[#allocation4 + $0x30] sm:$0xff]
    %v223 = vld [vmem:[#allocation4 + $0x38] sm:$0xff]
    %v224 = vld [vmem:[#allocation4 + $0x40] sm:$0xff]
    %v225 = vld [vmem:[#allocation4 + $0x48] sm:$0xff]
    %v226 = vld [vmem:[#allocation4 + $0x50] sm:$0xff]
    %v227 = vld [vmem:[#allocation4 + $0x58] sm:$0xff]
    %v228 = vld [vmem:[#allocation4 + $0x60] sm:$0xff]
    %v229 = vld [vmem:[#allocation4 + $0x68] sm:$0xff]
    %v230 = vld [vmem:[#allocation4 + $0x70] sm:$0xff]
    %v231 = vld [vmem:[#allocation4 + $0x78] sm:$0xff]
    %v232 = vld [vmem:[%s4] sm:$0x3]
    %v234 = vperm.slane %v232, 0
    %v235 = vperm.slane %v232, 1
    %v254 = vunpack.c.l.b16 %v216
    %v255 = vunpack.c.h.b16 %v216
    %v256 = vunpack.c.l.b16 %v217
    %v257 = vunpack.c.h.b16 %v217
    %v258 = vunpack.c.l.b16 %v218
    %v259 = vunpack.c.h.b16 %v218
    %v260 = vunpack.c.l.b16 %v219
    %v261 = vunpack.c.h.b16 %v219
    %v262 = vunpack.c.l.b16 %v220
    %v263 = vunpack.c.h.b16 %v220
    %v264 = vunpack.c.l.b16 %v221
    %v265 = vunpack.c.h.b16 %v221
    %v266 = vunpack.c.l.b16 %v222
    %v267 = vunpack.c.h.b16 %v222
    %v268 = vunpack.c.l.b16 %v223
    %v269 = vunpack.c.h.b16 %v223
    %v270 = vunpack.c.l.b16 %v224
    %v271 = vunpack.c.h.b16 %v224
    %v272 = vunpack.c.l.b16 %v225
    %v273 = vunpack.c.h.b16 %v225
    %v274 = vunpack.c.l.b16 %v226
    %v275 = vunpack.c.h.b16 %v226
    %v276 = vunpack.c.l.b16 %v227
    %v277 = vunpack.c.h.b16 %v227
    %v278 = vunpack.c.l.b16 %v228
    %v279 = vunpack.c.h.b16 %v228
    %v280 = vunpack.c.l.b16 %v229
    %v281 = vunpack.c.h.b16 %v229
    %v282 = vunpack.c.l.b16 %v230
    %v283 = vunpack.c.h.b16 %v230
    %v284 = vunpack.c.l.b16 %v231
    %v285 = vunpack.c.h.b16 %v231
    %v286 = vpack.c.b16 %v256, %v254
    %v287 = vpack.c.b16 %v257, %v255
    %v288 = vpack.c.b16 %v260, %v258
    %v289 = vpack.c.b16 %v261, %v259
    %v290 = vpack.c.b16 %v264, %v262
    %v291 = vpack.c.b16 %v265, %v263
    %v292 = vpack.c.b16 %v268, %v266
    %v293 = vpack.c.b16 %v269, %v267
    %v294 = vpack.c.b16 %v272, %v270
    %v295 = vpack.c.b16 %v273, %v271
    %v296 = vpack.c.b16 %v276, %v274
    %v297 = vpack.c.b16 %v277, %v275
    %v298 = vpack.c.b16 %v280, %v278
    %v299 = vpack.c.b16 %v281, %v279
    %v300 = vpack.c.b16 %v284, %v282
    %v301 = vpack.c.b16 %v285, %v283
    %318 = vmatpush.bf16.msra.mxu0 %v300
    %319 = vmatpush.bf16.msra.mxu0 %v298
    %320 = vmatpush.bf16.msra.mxu0 %v296
    %321 = vmatpush.bf16.msra.mxu0 %v294
    %322 = vmatpush.bf16.msra.mxu0 %v292
    %323 = vmatpush.bf16.msra.mxu0 %v290
    %324 = vmatpush.bf16.msra.mxu0 %v288
    %325 = vmatpush.bf16.msra.mxu0 %v286
    %326 = vmatmul.bf16.gmra.mxu0 %v215
    %v327 = vpop.f32.mrf.mxu0
    %v328 = vadd.f32 %v234, %v327
    %v329 = vpop.f32.mrf.mxu0
    %330 = vdwg.mxu0
    %331 = vmatpush.bf16.msra.mxu0 %v301
    %332 = vmatpush.bf16.msra.mxu0 %v299
    %333 = vmatpush.bf16.msra.mxu0 %v297
    %334 = vmatpush.bf16.msra.mxu0 %v295
    %335 = vmatpush.bf16.msra.mxu0 %v293
    %336 = vmatpush.bf16.msra.mxu0 %v291
    %337 = vmatpush.bf16.msra.mxu0 %v289
    %338 = vmatpush.bf16.msra.mxu0 %v287
    %339 = vmatmul.bf16.gmra.mxu0 %v215
    %v340 = vpop.f32.mrf.mxu0
    %v341 = vadd.f32 %v235, %v340
    %v342 = vpop.f32.mrf.mxu0
    %343 = vdwg.mxu0
    %344 = vrot.lane.b32.xlu0 %v328, 32
    %v345 = vpop.permute.xlu0 %344
    %346 = vrot.lane.b32.xlu0 %v341, 32
    %v347 = vpop.permute.xlu0 %346
    %v348 = vlaneseq
    %v349 = vand.u32 %v348, 127
    %vm350 = vcmp.lt.s32.totalorder %v349, 32
    %v351 = vsel %vm350, %v345, %v347
    %v352 = vsel %vm350, %v347, %v345
    %v353 = vmax.f32 %v328, %v352
    %v354 = vmax.f32 %v341, %v351
    %355 = vrot.lane.b32.xlu0 %v353, 64
    %v356 = vpop.permute.xlu0 %355
    %357 = vrot.lane.b32.xlu0 %v354, 64
    %v358 = vpop.permute.xlu0 %357
    %vm359 = vcmp.lt.s32.totalorder %v349, 64
    %v360 = vsel %vm359, %v356, %v358
    %v361 = vsel %vm359, %v358, %v356
    %v362 = vmax.f32 %v353, %v361
    %v363 = vmax.f32 %v354, %v360
    %v364 = vmax.f32 %v362, %v363
    %v365 = vsub.f32 %v328, %v364
    %v366 = vsub.f32 %v341, %v364
    %v367 = vmul.f32 %v365, 1.442695
    %v368 = vpow.pop %v367
    %v369 = vmul.f32 %v366, 1.442695
    %v370 = vpow.pop %v369
    %371 = vrot.lane.b32.xlu0 %v368, 32
    %v372 = vpop.permute.xlu0 %371
    %373 = vrot.lane.b32.xlu0 %v370, 32
    %v374 = vpop.permute.xlu0 %373
    %v375 = vsel %vm350, %v372, %v374
    %v376 = vsel %vm350, %v374, %v372
    %v377 = vadd.f32 %v368, %v376
    %v378 = vadd.f32 %v370, %v375
    %379 = vrot.lane.b32.xlu0 %v377, 64
    %v380 = vpop.permute.xlu0 %379
    %381 = vrot.lane.b32.xlu0 %v378, 64
    %v382 = vpop.permute.xlu0 %381
    %v383 = vsel %vm359, %v380, %v382
    %v384 = vsel %vm359, %v382, %v380
    %v385 = vadd.f32 %v377, %v384
    %v386 = vadd.f32 %v378, %v383
    %v387 = vadd.f32 %v385, %v386
    %v388 = vrcp.pop %v387
    %v389 = vmul.f32 %v387, %v388
    %v390 = vsub.f32 1.0, %v389
    %v391 = vmul.f32 %v388, %v390
    %v392 = vadd.f32 %v388, %v391
    %vm393 = vweird.f32 %v387
    %vm394 = vweird.f32 %v388
    %vm395 = vmor %vm393, %vm394
    %v396 = vsel %vm395, %v388, %v392
    %v397 = vand.u32 2147483647, %v387
    %vm398 = vcmp.eq.f32.partialorder %v397, 8.507059e+37
    %v399 = vand.u32 %v387, 2147483648
    %v400 = vor.u32 1.1754944e-38, %v399
    %v401 = vsel %vm398, %v400, %v396
    %v402 = vmul.f32 %v368, %v401
    %v403 = vmul.f32 %v370, %v401
    %v404 = vmul.f32 %v52, %v402
    %v405 = vmul.f32 %v53, %v403
    %406 = vst [vmem:[%s5] sm:$0xff] %v404
    %407 = vst [vmem:[%s5 + $0x8] sm:$0xff] %v405
    // Predicated region
    $region30: #{fwd.1} parent=1 // pred_check
      _
    $region31: #{fwd.1} parent=1 // pred_check_branch
      %409 = sbr.rel (0) target = $region33
    $region32: #{fwd.1} parent=1 // pred_region
      _
    $region33: #{fwd.1} parent=1 // pred_fallthru
      _
    // Predicated region
    $region34: #{fwd.1} parent=1 // pred_check
      _
    $region35: #{fwd.1} parent=1 // pred_check_branch
      %411 = sbr.rel (0) target = $region37
    $region36: #{fwd.1} parent=1 // pred_region
      _
    $region37: #{fwd.1} parent=1 // pred_fallthru
      _
    %412 = vsyncpa [#allocation3], 1
    %413 = vsyncpa [#allocation5], 1

</llo_original>
